<compile_context>
chip_gen: v7x
topology: tpu7x:2x2x1
jax: 0.10.0
libtpu: 0.0.40
codegen_flags: <defaults>
</compile_context>

<pallas_src>
import math

import jax
import jax.numpy as jnp
from jax.experimental import pallas as pl
from jax.experimental.pallas import tpu as pltpu

_LANE = 128                     # vreg lane width
_SUBLANE = 16                   # sublane multiple safe for both f32 and bf16 tiles
_TARGET_TILE_BYTES = 2 << 20    # ~2 MiB per grid step (HBM-roofline sweet spot)


# ----------------------------- kernel -----------------------------------------


def _pos_enc_add_kernel(x_ref, pe_ref, o_ref):
    """o = x + pe, accumulated in f32, stored in the input dtype. Dropout = identity."""
    # x_ref: (Bb, Fc) tile in the input dtype; pe_ref: (1, Fc) f32 tile.
    o_ref[...] = (x_ref[...].astype(jnp.float32) + pe_ref[...]).astype(o_ref.dtype)


# ----------------------------- init-time buffer (plain JAX) -------------------


def make_positional_encoding(d_model, max_len=400):
    """Builds the PE buffer exactly as the PyTorch __init__ does (shape (max_len, d_model))."""
    position = jnp.arange(0.0, max_len, dtype=jnp.float32)[:, None]          # (max_len, 1)
    div_term = jnp.exp(jnp.arange(0.0, d_model, 2, dtype=jnp.float32)
                       * (-math.log(10000.0) / d_model))                     # (d_model//2,)
    angles = position * div_term                                             # (max_len, d_model//2)
    pe = jnp.zeros((max_len, d_model), jnp.float32)
    pe = pe.at[:, 0::2].set(jnp.sin(angles))
    pe = pe.at[:, 1::2].set(jnp.cos(angles))
    return pe


# ----------------------------- tile selection ---------------------------------


def _choose_tiles(B, F, itemsize):
    """Pick (batch_block, feature_block) for the flattened (B, F=T*D) layout."""
    # Feature tile: a lane-aligned divisor of F, sized so that a sublane-aligned batch
    # block stays near the per-step byte target.
    Fc = F
    if F % _LANE == 0:
        max_fc = max(_LANE,
                     (_TARGET_TILE_BYTES // (_SUBLANE * itemsize)) // _LANE * _LANE)
        if F > max_fc:
            c = max_fc
            while c >= _LANE:           # largest lane-multiple divisor of F <= max_fc
                if F % c == 0:
                    Fc = c
                    break
                c -= _LANE
        elif B == 1 and F % (2 * _LANE) == 0:
            Fc = F // 2                 # give both v7x TensorCores work when B == 1

    # Batch tile: enough rows of Fc to reach the per-step target; must be a multiple of
    # the sublane tile unless it covers the whole batch (full-extent blocks are exempt).
    rows = max(1, _TARGET_TILE_BYTES // max(1, Fc * itemsize))
    Bb = min(B, rows)
    if Bb < B:
        Bb = (Bb // _SUBLANE) * _SUBLANE
        if Bb == 0:
            Bb = min(B, _SUBLANE)
    return Bb, Fc


# ----------------------------- forward wrapper --------------------------------


def positional_encoding_forward(x, pe, *, dropout_p=0.0):
    """x: (B, T, D) activations (batch-first); pe: (max_len, D) buffer. Returns (B, T, D)."""
    del dropout_p  # eval-mode dropout = identity (see TODO at top)
    B, T, D = x.shape
    assert T <= pe.shape[0] and D == pe.shape[1]
    out_dtype = x.dtype

    F = T * D
    x2 = x.reshape(B, F)                                        # lane-dense flat layout
    pe2 = pe[:T, :].astype(jnp.float32).reshape(1, F)           # pe[:, :T] flattened, f32

    Bb, Fc = _choose_tiles(B, F, jnp.dtype(out_dtype).itemsize)
    grid = (pl.cdiv(B, Bb), pl.cdiv(F, Fc))

    # Explicit VMEM budget: double-buffered x + out tiles + double-buffered pe chunk,
    # with headroom; capped well under v7x's 64 MiB physical VMEM.
    tile_bytes = Bb * Fc * jnp.dtype(out_dtype).itemsize
    pe_bytes = Fc * 4
    vmem_limit = int(min(48 << 20, max(16 << 20, 2 * (2 * tile_bytes + pe_bytes) + (4 << 20))))

    out2 = pl.pallas_call(
        _pos_enc_add_kernel,
        out_shape=jax.ShapeDtypeStruct((B, F), out_dtype),
        grid=grid,
        in_specs=[
            pl.BlockSpec((Bb, Fc), lambda b, f: (b, f)),   # activation tile
            pl.BlockSpec((1, Fc), lambda b, f: (0, f)),    # pe chunk, resident across batch
        ],
        out_specs=pl.BlockSpec((Bb, Fc), lambda b, f: (b, f)),
        compiler_params=pltpu.CompilerParams(
            dimension_semantics=("parallel", "parallel"),  # megacore-shard both axes
            vmem_limit_bytes=vmem_limit,
        ),
    )(x2, pe2)

    return out2.reshape(B, T, D)


# ----------------------------- demo -------------------------------------------


if __name__ == "__main__":
    B, T, d_model = 2, 8, 32
    max_len = 400
    dropout_p = 0.1   # constructor arg; identity in eval mode

    key = jax.random.PRNGKey(0)
    pe = make_positional_encoding(d_model, max_len=max_len)

    # f32 path
    x_f32 = jax.random.normal(key, (B, T, d_model), jnp.float32)
    out_f32 = positional_encoding_forward(x_f32, pe, dropout_p=dropout_p)
    jax.block_until_ready(out_f32)
    assert out_f32.shape == (B, T, d_model) and out_f32.dtype == jnp.float32
    ref_f32 = x_f32 + pe[None, :T, :]
    assert jnp.allclose(out_f32, ref_f32, atol=1e-6), float(jnp.max(jnp.abs(out_f32 - ref_f32)))

    # bf16 path (dtype passthrough: bf16 in -> bf16 out, f32 accumulation in-kernel)
    x_bf16 = x_f32.astype(jnp.bfloat16)
    out_bf16 = positional_encoding_forward(x_bf16, pe, dropout_p=dropout_p)
    jax.block_until_ready(out_bf16)
    assert out_bf16.shape == (B, T, d_model) and out_bf16.dtype == jnp.bfloat16
    ref_bf16 = (x_bf16.astype(jnp.float32) + pe[None, :T, :]).astype(jnp.bfloat16)
    assert jnp.allclose(out_bf16.astype(jnp.float32), ref_bf16.astype(jnp.float32),
                        atol=2e-2), "bf16 mismatch"

    print("KERNEL_OK")
</pallas_src>

<mosaic_0001>
module attributes {stable_mosaic.version = 11 : i64} {
  func.func @_pos_enc_add_kernel(%arg0: i32, %arg1: i32, %arg2: memref<2x256xf32, #tpu.memory_space<vmem>>, %arg3: memref<1x256xf32, #tpu.memory_space<vmem>>, %arg4: memref<2x256xf32, #tpu.memory_space<vmem>>) attributes {dimension_semantics = [#tpu.dimension_semantics<parallel>, #tpu.dimension_semantics<parallel>], iteration_bounds = array<i64: 1, 1>, scalar_prefetch = 0 : i64, scratch_operands = 0 : i64, tpu.core_type = #tpu.core_type<tc>, window_params = [{transform_indices = @transform_0, window_bounds = array<i64: 2, 256>}, {transform_indices = @transform_1, window_bounds = array<i64: 1, 256>}, {transform_indices = @transform_2, window_bounds = array<i64: 2, 256>}]} {
    %c0 = arith.constant 0 : index
    %c0_0 = arith.constant 0 : index
    %0 = vector.load %arg2[%c0, %c0_0] : memref<2x256xf32, #tpu.memory_space<vmem>>, vector<2x256xf32>
    %c0_1 = arith.constant 0 : index
    %c0_2 = arith.constant 0 : index
    %1 = vector.load %arg3[%c0_1, %c0_2] : memref<1x256xf32, #tpu.memory_space<vmem>>, vector<1x256xf32>
    %2 = vector.broadcast %1 : vector<1x256xf32> to vector<2x256xf32>
    %3 = arith.addf %0, %2 : vector<2x256xf32>
    %c0_3 = arith.constant 0 : index
    %c0_4 = arith.constant 0 : index
    %4 = vector.load %arg4[%c0_3, %c0_4] : memref<2x256xf32, #tpu.memory_space<vmem>>, vector<2x256xf32>
    tpu.vector_store %arg4[%c0_3, %c0_4], %3 {strides = array<i32>} : memref<2x256xf32, #tpu.memory_space<vmem>>, vector<2x256xf32>,
    return
  }
  func.func @transform_0(%arg0: i32, %arg1: i32) -> (i32, i32) {
    %c0_i32 = arith.constant 0 : i32
    return %arg0, %arg1 : i32, i32
  }
  func.func @transform_1(%arg0: i32, %arg1: i32) -> (i32, i32) {
    %c0_i32 = arith.constant 0 : i32
    %c0_i32_0 = arith.constant 0 : i32
    return %c0_i32, %arg1 : i32, i32
  }
  func.func @transform_2(%arg0: i32, %arg1: i32) -> (i32, i32) {
    %c0_i32 = arith.constant 0 : i32
    return %arg0, %arg1 : i32, i32
  }
}

</mosaic_0001>

<llo_original>
// kernel: tpu_custom_call.1
$region0: #{tpu_custom_call.1}
  #allocation0 [shape = 'u32[]', space=smem, size = 0x4, offset = 0x4, fixed_abs, tag = 'smem constant byte address 0x4 - core index']
  #allocation1 [shape = 'u32[144,128]{1,0:T(1,128)}', space=vmem, size = 0x12000, scoped, tag = 'internal scratch']
  %s0 = inlined_call_operand.hbm [shape: f32[2,256], index: 0, kind: input, shape index: {}]
  %s1 = inlined_call_operand.vmem [shape: f32[1,256], index: 1, kind: input, shape index: {}]
  %s2 = inlined_call_operand.hbm [shape: f32[2,256], index: 2, kind: output, shape index: {}]
  %s3 = sld [smem:[#allocation0]]
  $region22: #{tpu_custom_call.1} parent=0
    _
  %s5 = ssub.s32 1, %s3
  %s6 = scalar_select 0, %s5, %s3
  $region1: #{tpu_custom_call.1} parent=0
    #allocation2 [shape = 'u8[2048]{0}', space=vmem, size = 0x800, scoped, tag = 'input window, operand 0, single buffered']
    #allocation3 [shape = 's32[1]{0}', space=sflag, size = 0x4, scoped, tag = 'scoped memory for tpu_custom_call.1']
    #allocation4 [shape = 's32[1]{0}', space=sflag, size = 0x4, scoped, tag = 'scoped memory for tpu_custom_call.1']
    #allocation5 [shape = 'u8[2048]{0}', space=vmem, size = 0x800, scoped, tag = 'output window, operand 0, single buffered']
    %7 = vsyncpa [#allocation3], 0
    %8 = vsyncpa [#allocation4], 0
    // Predicated region
    $region2: #{tpu_custom_call.1} parent=1 // pred_check
      _
    $region3: #{tpu_custom_call.1} parent=1 // pred_check_branch
      %10 = sbr.rel (0) target = $region5
    $region4: #{tpu_custom_call.1} parent=1 // pred_region
      %s12 = ssub.s32 64, 64
      %13 = vsyncadd [#allocation3], %s12
      %s15 = sshll.u32 [#allocation2], 4
      %s16 = int_to_ptr.vmem [resolvable:$true] %s15
      %18 = dma.hbm_to_vmem [thread:$0]  %s0, 64, %s16, [#allocation3]
    $region5: #{tpu_custom_call.1} parent=1 // pred_fallthru
      _
    // Predicated region
    $region6: #{tpu_custom_call.1} parent=1 // pred_check
      _
    $region7: #{tpu_custom_call.1} parent=1 // pred_check_branch
      %20 = sbr.rel (0) target = $region9
    $region8: #{tpu_custom_call.1} parent=1 // pred_region
      _
    $region9: #{tpu_custom_call.1} parent=1 // pred_fallthru
      _
    // Predicated region
    $region10: #{tpu_custom_call.1} parent=1 // pred_check
      _
    $region11: #{tpu_custom_call.1} parent=1 // pred_check_branch
      %22 = sbr.rel (0) target = $region13
    $region12: #{tpu_custom_call.1} parent=1 // pred_region
      %23 = dma.done [#allocation3], 64
    $region13: #{tpu_custom_call.1} parent=1 // pred_fallthru
      _
    %v24 = vld [vmem:[#allocation2] sm:$0xf]
    %v25 = vld [vmem:[%s1] sm:$0x3]
    %v27 = vlaneseq
    %v28 = vshrl.u32 %v27, 7
    %v29 = vsub.s32 0, %v28
    %v30 = vrot.slane %v25, %v29
    %v31 = vlaneseq
    %v32 = vshrl.u32 %v31, 7
    %v33 = vsub.s32 1, %v32
    %v34 = vrot.slane %v25, %v33
    %v35 = vcombine.low %v30, %v34
    %v37 = vunpack.c.l.s4 1983009808
    %v38 = vunpack.c.0.s8 %v37
    %v39 = vlaneseq
    %v40 = vshrl.u32 %v39, 7
    %v41 = vsub.s32 %v38, %v40
    %v42 = vrot.slane %v35, %v41
    %v44 = vadd.f32 %v24, %v42
    %45 = vst [vmem:[#allocation5] sm:$0xf] %v44
    // Predicated region
    $region14: #{tpu_custom_call.1} parent=1 // pred_check
      _
    $region15: #{tpu_custom_call.1} parent=1 // pred_check_branch
      %47 = sbr.rel (0) target = $region17
    $region16: #{tpu_custom_call.1} parent=1 // pred_region
      %s49 = ssub.s32 64, 64
      %50 = vsyncadd [#allocation4], %s49
      %s52 = sshll.u32 [#allocation5], 4
      %s53 = int_to_ptr.vmem [resolvable:$true] %s52
      %55 = dma.vmem_to_hbm [thread:$0]  %s53, 64, %s2, [#allocation4]
    $region17: #{tpu_custom_call.1} parent=1 // pred_fallthru
      _
    // Predicated region
    $region18: #{tpu_custom_call.1} parent=1 // pred_check
      _
    $region19: #{tpu_custom_call.1} parent=1 // pred_check_branch
      %57 = sbr.rel (0) target = $region21
    $region20: #{tpu_custom_call.1} parent=1 // pred_region
      %58 = dma.done [#allocation4], 64
    $region21: #{tpu_custom_call.1} parent=1 // pred_fallthru
      _
    %59 = vsyncpa [#allocation3], 1
    %60 = vsyncpa [#allocation4], 1

</llo_original>
